<compile_context>
chip_gen: v5e
topology: v5e:2x2
jax: 0.10.0
libtpu: 0.0.40
codegen_flags: <defaults>
</compile_context>

<pallas_src>
import functools

import jax
import jax.numpy as jnp
from jax.experimental import pallas as pl
from jax.experimental.pallas import tpu as pltpu

D = 32         # model dim
H = 128        # hidden dim (mult=4)
P_DROP = 0.1   # dropout prob inside the wrapped net
_KEEP_SCALE = 1.0 / (1.0 - P_DROP)
# Dropout threshold on full 32-bit uniform ints (rounded, not truncated).
_DROP_THRESH_U32 = int(round(P_DROP * (2 ** 32))) & 0xFFFFFFFF


def _default_elementwise_dtype():
    """bf16 elementwise on v6e/v7x (packed bf16 VALU/EUP); f32 on v5e/older."""
    try:
        kind = jax.devices()[0].device_kind.lower()
    except Exception:
        return jnp.float32
    if ("v5" in kind) or ("v4" in kind) or ("v3" in kind) or ("v2" in kind):
        return jnp.float32
    return jnp.bfloat16


def _ffn_dropout_kernel(seed_ref, x_ref, w1_ref, b1_ref, w2_ref, b2_ref, o_ref,
                        *, compute_dtype):
    """One (TILE_M, D) row tile of  y = Dropout(GELU(x@W1+b1)) @ W2 + b2."""
    tile_m = x_ref.shape[0]
    hdim = w1_ref.shape[1]

    # ---- first matmul: bf16 operands on the MXU, f32 accumulation ----------
    h = jnp.dot(x_ref[...].astype(jnp.bfloat16), w1_ref[...],
                preferred_element_type=jnp.float32)            # (tm, H) f32

    # Drop to the elementwise compute dtype (bf16 on v6e/v7x halves VALU/EUP
    # work; the bf16 cast needed before matmul #2 becomes free).
    h = h.astype(compute_dtype) + b1_ref[...].astype(compute_dtype)

    # ---- GELU (tanh approximation) ------------------------------------------
    c0 = jnp.asarray(0.7978845608028654, compute_dtype)
    c1 = jnp.asarray(0.044715, compute_dtype)
    half = jnp.asarray(0.5, compute_dtype)
    one = jnp.asarray(1.0, compute_dtype)
    h = half * h * (one + jnp.tanh(c0 * (h + c1 * (h * h * h))))

    # ---- dropout mask: counter-based hash of (seed, global element id) -----
    # Grid/tiling- and core-assignment-invariant -> exact replay from the
    # recorded seed alone. Strength-reduced: element index built with a
    # shift/OR (H is a power of two) and a single scalar per-tile offset; the
    # 32-bit hash is compared directly against a uint32 threshold.
    seed = seed_ref[0]                                   # non-negative int32
    row0 = pl.program_id(0) * tile_m                     # scalar
    rows = jax.lax.broadcasted_iota(jnp.int32, (tile_m, hdim), 0)
    cols = jax.lax.broadcasted_iota(jnp.int32, (tile_m, hdim), 1)
    if (hdim & (hdim - 1)) == 0:
        shift = hdim.bit_length() - 1
        local = (rows << shift) | cols                   # no per-element imul
        base = row0 << shift                             # scalar
    else:
        local = rows * hdim + cols
        base = row0 * hdim
    idx = (local + base).astype(jnp.uint32)
    z = idx + seed.astype(jnp.uint32) * jnp.uint32(0x9E3779B9)   # scalar imul
    z = z ^ (z >> 16)                                    # murmur3 finalizer mix
    z = z * jnp.uint32(0x85EBCA6B)
    z = z ^ (z >> 13)
    z = z * jnp.uint32(0xC2B2AE35)
    z = z ^ (z >> 16)
    keep = z >= jnp.uint32(_DROP_THRESH_U32)             # direct u32 compare
    h = jnp.where(keep, h, jnp.asarray(0.0, compute_dtype))

    # ---- second matmul; keep-scale folded onto the small (tm, D) output ----
    y = jnp.dot(h.astype(jnp.bfloat16), w2_ref[...],
                preferred_element_type=jnp.float32)
    y = y * jnp.float32(_KEEP_SCALE) + b2_ref[...]
    # NOTE: with D=32 the output is only 32/128 lane-dense; treat a lane-dense
    # relayout as a second-order optimization (measure vst pressure first).
    o_ref[...] = y.astype(o_ref.dtype)


def _round_up_8(n):
    return ((n + 7) // 8) * 8


def make_ffn_net(w1, b1, w2, b2, tile_m=4096, compute_dtype=None):
    """Returns net(x, seed) -> y (same shape as x), fused FFN in one kernel."""
    if compute_dtype is None:
        compute_dtype = _default_elementwise_dtype()
    # bf16 weights feed the MXU natively and halve weight DMA; biases stay f32
    # (cast to the compute dtype inside the kernel, one vreg per grid step).
    w1_bf = w1.astype(jnp.bfloat16)
    w2_bf = w2.astype(jnp.bfloat16)
    b1_f = b1.astype(jnp.float32)
    b2_f = b2.astype(jnp.float32)
    d_in, hdim = w1.shape

    kernel = functools.partial(_ffn_dropout_kernel, compute_dtype=compute_dtype)

    def net(x, seed):
        B, S, d = x.shape
        assert d == d_in
        M = B * S
        xf = x.reshape(M, d)

        # Row tile: big tiles amortize the ~0.35 us per-grid-step overhead; at
        # tm=4096 the x/out double-buffers + (tm,128) temporaries are ~10-14
        # MiB, far under even v7x's 64 MiB VMEM. Cap so there are >= 2 grid
        # steps whenever possible, so dimension_semantics=("parallel",) can
        # shard row tiles across v7x's 2 TensorCores.
        tm = min(tile_m, M)
        half = _round_up_8(-(-M // 2))
        if half < M:
            tm = min(tm, half)
        if tm < M:
            tm = max(8, (tm // 8) * 8)      # sublane rule (or tm == M)
        grid_m = pl.cdiv(M, tm)

        seed_arr = jnp.asarray([seed], dtype=jnp.int32)

        out = pl.pallas_call(
            kernel,
            out_shape=jax.ShapeDtypeStruct((M, d), x.dtype),
            grid_spec=pltpu.PrefetchScalarGridSpec(
                num_scalar_prefetch=1,               # seed lands in SMEM
                grid=(grid_m,),
                in_specs=[
                    # x row-tiles stream & double-buffer across the grid.
                    pl.BlockSpec((tm, d), lambda i, s: (i, 0)),
                    # Weights/biases: constant block index -> resident in VMEM.
                    pl.BlockSpec((d_in, hdim), lambda i, s: (0, 0)),
                    pl.BlockSpec((1, hdim), lambda i, s: (0, 0)),
                    pl.BlockSpec((hdim, d_in), lambda i, s: (0, 0)),
                    pl.BlockSpec((1, d_in), lambda i, s: (0, 0)),
                ],
                out_specs=pl.BlockSpec((tm, d), lambda i, s: (i, 0)),
            ),
            compiler_params=pltpu.CompilerParams(
                # Row tiles are independent -> shard across v7x's 2 TCs.
                dimension_semantics=("parallel",),
                # Explicit cap with headroom even on v7x's 64 MiB physical VMEM.
                vmem_limit_bytes=48 * 1024 * 1024,
            ),
        )(seed_arr, xf, w1_bf, b1_f, w2_bf, b2_f)
        return out.reshape(B, S, d)

    return net


class Deterministic:
    """JAX analog of layers/transformer/Reformer.py::Deterministic."""

    def __init__(self, net):
        self.net = net
        self._rng_counter = 0       # analog of the framework's global RNG state
        self.recorded_state = None  # analog of self.cpu_state
        # TODO(synk): torch.cuda get_device_states/set_device_states (per-GPU
        # RNG capture) has no Pallas/TPU equivalent; only the CPU-state path
        # is modeled, as a single recorded integer seed.

    def record_rng(self, *args):
        self.recorded_state = self._rng_counter

    def forward(self, x, record_rng=False, set_rng=False):
        if record_rng:
            self.record_rng(x)
        if not set_rng:
            seed = self._rng_counter
            self._rng_counter += 1   # consume global randomness like torch RNG
            return self.net(x, seed)
        # fork_rng + set_rng_state: replay the recorded state without touching
        # the "global" counter.
        assert self.recorded_state is not None, "set_rng before record_rng"
        return self.net(x, self.recorded_state)


if __name__ == "__main__":
    key = jax.random.PRNGKey(0)
    kx, k1, k2, kx2 = jax.random.split(key, 4)

    # Small shapes: batch=2, seq=8, dim=32, hidden=128.
    x = jax.random.normal(kx, (2, 8, D), dtype=jnp.float32)
    w1 = jax.random.normal(k1, (D, H), dtype=jnp.float32) * 0.02
    b1 = jnp.zeros((1, H), dtype=jnp.float32)
    w2 = jax.random.normal(k2, (H, D), dtype=jnp.float32) * 0.02
    b2 = jnp.zeros((1, D), dtype=jnp.float32)

    det = Deterministic(make_ffn_net(w1, b1, w2, b2))

    # Record pass (forward of the reversible block).
    y1 = det.forward(x, record_rng=True)
    jax.block_until_ready(y1)

    # Replay pass (backward of the reversible block): dropout must be identical.
    y2 = det.forward(x, set_rng=True)
    jax.block_until_ready(y2)

    assert y1.shape == x.shape
    assert bool(jnp.all(jnp.isfinite(y1)))
    assert bool(jnp.allclose(y1, y2)), "RNG replay produced a different output"

    # The mask is keyed on global element indices, so replay stays exact even
    # if the tiling / grid layout changes between record and replay
    # (e.g. a different TILE_M on v6e vs v7x, or megacore sharding on v7x).
    x_big = jax.random.normal(kx2, (2, 256, D), dtype=jnp.float32)   # M = 512
    net_a = make_ffn_net(w1, b1, w2, b2, tile_m=4096)  # 2 grid steps (capped)
    net_b = make_ffn_net(w1, b1, w2, b2, tile_m=64)    # 8 grid steps
    ya = net_a(x_big, 7)
    yb = net_b(x_big, 7)
    jax.block_until_ready((ya, yb))
    assert bool(jnp.allclose(ya, yb)), "dropout mask depends on tiling"

    print("KERNEL_OK")
</pallas_src>

<mosaic_0001>
module attributes {stable_mosaic.version = 11 : i64} {
  func.func @_ffn_dropout_kernel(%arg0: i32, %arg1: memref<1xi32, #tpu.memory_space<smem>>, %arg2: memref<8x32xf32, #tpu.memory_space<vmem>>, %arg3: memref<32x128xbf16, #tpu.memory_space<vmem>>, %arg4: memref<1x128xf32, #tpu.memory_space<vmem>>, %arg5: memref<128x32xbf16, #tpu.memory_space<vmem>>, %arg6: memref<1x32xf32, #tpu.memory_space<vmem>>, %arg7: memref<8x32xf32, #tpu.memory_space<vmem>>) attributes {dimension_semantics = [#tpu.dimension_semantics<parallel>], iteration_bounds = array<i64: 2>, scalar_prefetch = 1 : i64, scratch_operands = 0 : i64, tpu.core_type = #tpu.core_type<tc>, window_params = [{transform_indices = @transform_0, window_bounds = array<i64: 8, 32>}, {pipeline_mode = #tpu.pipeline_mode<synchronous>, transform_indices = @transform_1, window_bounds = array<i64: 32, 128>}, {pipeline_mode = #tpu.pipeline_mode<synchronous>, transform_indices = @transform_2, window_bounds = array<i64: 1, 128>}, {pipeline_mode = #tpu.pipeline_mode<synchronous>, transform_indices = @transform_3, window_bounds = array<i64: 128, 32>}, {pipeline_mode = #tpu.pipeline_mode<synchronous>, transform_indices = @transform_4, window_bounds = array<i64: 1, 32>}, {transform_indices = @transform_5, window_bounds = array<i64: 8, 32>}]} {
    %c0 = arith.constant 0 : index
    %c0_0 = arith.constant 0 : index
    %0 = vector.load %arg2[%c0, %c0_0] : memref<8x32xf32, #tpu.memory_space<vmem>>, vector<8x32xf32>
    %1 = arith.truncf %0 : vector<8x32xf32> to vector<8x32xbf16>
    %c0_1 = arith.constant 0 : index
    %c0_2 = arith.constant 0 : index
    %2 = vector.load %arg3[%c0_1, %c0_2] : memref<32x128xbf16, #tpu.memory_space<vmem>>, vector<32x128xbf16>
    %cst = arith.constant dense<0.000000e+00> : vector<8x128xf32>
    %3 = tpu.matmul %1, %2, %cst {dimension_numbers = #tpu.dot_dimension_numbers<[1], [0], [0], [1], [0, 0, 1, 1], [], []>} : vector<8x32xbf16>, vector<32x128xbf16>, vector<8x128xf32> -> vector<8x128xf32>
    %4 = arith.truncf %3 : vector<8x128xf32> to vector<8x128xbf16>
    %c0_3 = arith.constant 0 : index
    %c0_4 = arith.constant 0 : index
    %5 = vector.load %arg4[%c0_3, %c0_4] : memref<1x128xf32, #tpu.memory_space<vmem>>, vector<1x128xf32>
    %6 = arith.truncf %5 : vector<1x128xf32> to vector<1x128xbf16>
    %7 = vector.broadcast %6 : vector<1x128xbf16> to vector<8x128xbf16>
    %8 = arith.addf %4, %7 : vector<8x128xbf16>
    %cst_5 = arith.constant 5.000000e-01 : bf16
    %9 = vector.broadcast %cst_5 : bf16 to vector<8x128xbf16>
    %10 = arith.mulf %9, %8 : vector<8x128xbf16>
    %11 = arith.mulf %8, %8 : vector<8x128xbf16>
    %12 = arith.mulf %11, %8 : vector<8x128xbf16>
    %cst_6 = arith.constant 4.467770e-02 : bf16
    %13 = vector.broadcast %cst_6 : bf16 to vector<8x128xbf16>
    %14 = arith.mulf %13, %12 : vector<8x128xbf16>
    %15 = arith.addf %8, %14 : vector<8x128xbf16>
    %cst_7 = arith.constant 7.968750e-01 : bf16
    %16 = vector.broadcast %cst_7 : bf16 to vector<8x128xbf16>
    %17 = arith.mulf %16, %15 : vector<8x128xbf16>
    %18 = math.tanh %17 : vector<8x128xbf16>
    %cst_8 = arith.constant 1.000000e+00 : bf16
    %19 = vector.broadcast %cst_8 : bf16 to vector<8x128xbf16>
    %20 = arith.addf %19, %18 : vector<8x128xbf16>
    %21 = arith.mulf %10, %20 : vector<8x128xbf16>
    %c0_9 = arith.constant 0 : index
    %22 = memref.load %arg1[%c0_9] : memref<1xi32, #tpu.memory_space<smem>>
    %c8_i32 = arith.constant 8 : i32
    %23 = arith.muli %arg0, %c8_i32 : i32
    %24 = tpu.iota {dimensions = array<i32: 0>} : vector<8x128xi32>
    %25 = tpu.iota {dimensions = array<i32: 1>} : vector<8x128xi32>
    %c7_i32 = arith.constant 7 : i32
    %26 = vector.broadcast %c7_i32 : i32 to vector<8x128xi32>
    %27 = arith.shli %24, %26 : vector<8x128xi32>
    %28 = arith.ori %27, %25 : vector<8x128xi32>
    %c7_i32_10 = arith.constant 7 : i32
    %29 = arith.shli %23, %c7_i32_10 : i32
    %30 = vector.broadcast %29 : i32 to vector<8x128xi32>
    %31 = arith.addi %28, %30 : vector<8x128xi32>
    %c-1640531527_i32 = arith.constant -1640531527 : i32
    %32 = arith.muli %22, %c-1640531527_i32 : i32
    %33 = vector.broadcast %32 : i32 to vector<8x128xi32>
    %34 = arith.addi %31, %33 : vector<8x128xi32>
    %c16_i32 = arith.constant 16 : i32
    %35 = vector.broadcast %c16_i32 : i32 to vector<8x128xi32>
    %36 = arith.shrui %34, %35 : vector<8x128xi32>
    %37 = arith.xori %34, %36 : vector<8x128xi32>
    %c-2048144789_i32 = arith.constant -2048144789 : i32
    %38 = vector.broadcast %c-2048144789_i32 : i32 to vector<8x128xi32>
    %39 = arith.muli %37, %38 : vector<8x128xi32>
    %c13_i32 = arith.constant 13 : i32
    %40 = vector.broadcast %c13_i32 : i32 to vector<8x128xi32>
    %41 = arith.shrui %39, %40 : vector<8x128xi32>
    %42 = arith.xori %39, %41 : vector<8x128xi32>
    %c-1028477387_i32 = arith.constant -1028477387 : i32
    %43 = vector.broadcast %c-1028477387_i32 : i32 to vector<8x128xi32>
    %44 = arith.muli %42, %43 : vector<8x128xi32>
    %c16_i32_11 = arith.constant 16 : i32
    %45 = vector.broadcast %c16_i32_11 : i32 to vector<8x128xi32>
    %46 = arith.shrui %44, %45 : vector<8x128xi32>
    %47 = arith.xori %44, %46 : vector<8x128xi32>
    %c429496730_i32 = arith.constant 429496730 : i32
    %48 = vector.broadcast %c429496730_i32 : i32 to vector<8x128xi32>
    %49 = arith.cmpi uge, %47, %48 : vector<8x128xi32>
    %cst_12 = arith.constant 0.000000e+00 : bf16
    %50 = vector.broadcast %cst_12 : bf16 to vector<8x128xbf16>
    %51 = arith.select %49, %21, %50 : vector<8x128xi1>, vector<8x128xbf16>
    %c0_13 = arith.constant 0 : index
    %c0_14 = arith.constant 0 : index
    %52 = vector.load %arg5[%c0_13, %c0_14] : memref<128x32xbf16, #tpu.memory_space<vmem>>, vector<128x32xbf16>
    %cst_15 = arith.constant dense<0.000000e+00> : vector<8x32xf32>
    %53 = tpu.matmul %51, %52, %cst_15 {dimension_numbers = #tpu.dot_dimension_numbers<[1], [0], [0], [1], [0, 0, 1, 1], [], []>} : vector<8x128xbf16>, vector<128x32xbf16>, vector<8x32xf32> -> vector<8x32xf32>
    %cst_16 = arith.constant 1.11111116 : f32
    %54 = vector.broadcast %cst_16 : f32 to vector<8x32xf32>
    %55 = arith.mulf %53, %54 : vector<8x32xf32>
    %c0_17 = arith.constant 0 : index
    %c0_18 = arith.constant 0 : index
    %56 = vector.load %arg6[%c0_17, %c0_18] : memref<1x32xf32, #tpu.memory_space<vmem>>, vector<1x32xf32>
    %57 = vector.broadcast %56 : vector<1x32xf32> to vector<8x32xf32>
    %58 = arith.addf %55, %57 : vector<8x32xf32>
    %c0_19 = arith.constant 0 : index
    %c0_20 = arith.constant 0 : index
    %59 = vector.load %arg7[%c0_19, %c0_20] : memref<8x32xf32, #tpu.memory_space<vmem>>, vector<8x32xf32>
    tpu.vector_store %arg7[%c0_19, %c0_20], %58 {strides = array<i32>} : memref<8x32xf32, #tpu.memory_space<vmem>>, vector<8x32xf32>,
    return
  }
  func.func @transform_0(%arg0: i32, %arg1: memref<1xi32, #tpu.memory_space<smem>>) -> (i32, i32) {
    %c0_i32 = arith.constant 0 : i32
    %c0_i32_0 = arith.constant 0 : i32
    return %arg0, %c0_i32 : i32, i32
  }
  func.func @transform_1(%arg0: i32, %arg1: memref<1xi32, #tpu.memory_space<smem>>) -> (i32, i32) {
    %c0_i32 = arith.constant 0 : i32
    %c0_i32_0 = arith.constant 0 : i32
    %c0_i32_1 = arith.constant 0 : i32
    return %c0_i32, %c0_i32_0 : i32, i32
  }
  func.func @transform_2(%arg0: i32, %arg1: memref<1xi32, #tpu.memory_space<smem>>) -> (i32, i32) {
    %c0_i32 = arith.constant 0 : i32
    %c0_i32_0 = arith.constant 0 : i32
    %c0_i32_1 = arith.constant 0 : i32
    return %c0_i32, %c0_i32_0 : i32, i32
  }
  func.func @transform_3(%arg0: i32, %arg1: memref<1xi32, #tpu.memory_space<smem>>) -> (i32, i32) {
    %c0_i32 = arith.constant 0 : i32
    %c0_i32_0 = arith.constant 0 : i32
    %c0_i32_1 = arith.constant 0 : i32
    return %c0_i32, %c0_i32_0 : i32, i32
  }
  func.func @transform_4(%arg0: i32, %arg1: memref<1xi32, #tpu.memory_space<smem>>) -> (i32, i32) {
    %c0_i32 = arith.constant 0 : i32
    %c0_i32_0 = arith.constant 0 : i32
    %c0_i32_1 = arith.constant 0 : i32
    return %c0_i32, %c0_i32_0 : i32, i32
  }
  func.func @transform_5(%arg0: i32, %arg1: memref<1xi32, #tpu.memory_space<smem>>) -> (i32, i32) {
    %c0_i32 = arith.constant 0 : i32
    %c0_i32_0 = arith.constant 0 : i32
    return %arg0, %c0_i32 : i32, i32
  }
}

</mosaic_0001>

<llo_original>
// kernel: tpu_custom_call.1
$region0: #{tpu_custom_call.1}
  #allocation0 [shape = 'u32[]', space=smem, size = 0x4, offset = 0x4, fixed_abs, tag = 'smem constant byte address 0x4 - core index']
  #allocation1 [shape = 'u32[72,128]{1,0:T(1,128)}', space=vmem, size = 0x9000, scoped, tag = 'internal scratch']
  #allocation2 [shape = 's32[1]{0}', space=sflag, size = 0x4, scoped, tag = 'scoped memory for tpu_custom_call.1']
  #allocation3 [shape = 's32[1]{0:T(128)S(6)}', space=smem, size = 0x200, scoped, tag = 'prefetched SMEM operand 0']
  %s0 = inlined_call_operand.<no memory space> [shape: s32[1], index: 0, kind: input, shape index: {}]
  %s1 = inlined_call_operand.vmem [shape: f32[16,32], index: 1, kind: input, shape index: {}]
  %s2 = inlined_call_operand.vmem [shape: bf16[32,128], index: 2, kind: input, shape index: {}]
  %s3 = inlined_call_operand.vmem [shape: f32[1,128], index: 3, kind: input, shape index: {}]
  %s4 = inlined_call_operand.vmem [shape: bf16[128,32], index: 4, kind: input, shape index: {}]
  %s5 = inlined_call_operand.vmem [shape: f32[1,32], index: 5, kind: input, shape index: {}]
  %s6 = inlined_call_operand.hbm [shape: f32[16,32], index: 6, kind: output, shape index: {}]
  %s7 = sld [smem:[#allocation0]]
  $region53: #{tpu_custom_call.1} parent=0
    _
  %s9 = ssub.s32 1, %s7
  %s10 = scalar_select 0, %s9, %s7
  %11 = sst [smem:[#allocation3]] %s0
  $region1: #{tpu_custom_call.1} parent=0
    #allocation4 [shape = 'u8[8192]{0}', space=vmem, size = 0x2000, scoped, tag = 'output window, operand 0']
    #allocation5 [shape = 's32[2]{0}', space=sflag, size = 0x8, scoped, tag = 'scoped memory for tpu_custom_call.1']
    %12 = vsyncpa [#allocation5], 0
    %s13 = scalar_lea.sflag [#allocation5], 1
    %14 = vsyncpa %s13, 0
    loop: start=0, step=1, limit=4
    $region2: #{tpu_custom_call.1} parent=1 // loop_pre_header
      _
    $region3: #{tpu_custom_call.1} parent=1 // loop_header
      %s16 = sphi 0, %s20
      %p17 = scmp.ge.s32.totalorder %s16, 4
      %s26 = sphi 0, %s28
      %s29 = sphi 0, %s26
      %s30 = sphi 0, %s29
      %s46 = sphi 0, %s30
      %s50 = sphi 0, %s50
      %s52 = sphi 0, %s50
      %s53 = sphi 0, %s52
      %s67 = sphi 0, %s53
      %s71 = sphi 0, %s71
      %s73 = sphi 0, %s71
      %s74 = sphi 0, %s73
      %s88 = sphi 0, %s74
      %s92 = sphi 0, %s92
      %s94 = sphi 0, %s92
      %s95 = sphi 0, %s94
      %s109 = sphi 0, %s95
      %s113 = sphi 0, %s113
      %s115 = sphi 0, %s113
      %s116 = sphi 0, %s115
      %s130 = sphi 0, %s116
      %s136 = sphi 0, %s138
      %s139 = sphi 0, %s136
      %s140 = sphi 0, %s139
      %s156 = sphi 0, %s140
    $region4: #{tpu_custom_call.1} parent=1 // loop_header_branch
      %19 = sbr.rel (%p17) target = $region8
    $region5: #{tpu_custom_call.1} parent=1 // loop_body
      %s21 = ssub.s32 %s16, 1
      %s22 = ssub.s32 %s16, 2
      %s23 = sadd.s32 %s16, 1
      %s24 = ssub.s32 %s16, %s23
      %p25 = scmp.eq.s32.totalorder %s24, 0
      %s27 = sadd.s32 %s26, 1
      %s28 = scalar_select %p25, %s26, %s27
      %p31 = pneg %p25
      %p32 = scmp.eq.s32.totalorder %s16, 1
      %p33 = por %p31, %p32
      %p34 = scmp.ne.s32.totalorder %s26, %s29
      %p35 = scmp.eq.s32.totalorder %s16, 0
      %p36 = por %p34, %p35
      %p37 = scmp.ne.s32.totalorder %s26, %s29
      %p38 = scmp.eq.s32.totalorder %s21, 1
      %p39 = por %p37, %p38
      %p40 = scmp.ne.s32.totalorder %s29, %s30
      %p41 = scmp.eq.s32.totalorder %s21, 0
      %p42 = por %p40, %p41
      %p43 = scmp.ne.s32.totalorder %s29, %s30
      %p44 = scmp.eq.s32.totalorder %s22, 1
      %p45 = por %p43, %p44
      %p47 = scmp.ne.s32.totalorder %s30, %s46
      %p48 = scmp.eq.s32.totalorder %s22, 0
      %p49 = por %p47, %p48
      %s51 = sadd.s32 %s50, 1
      %p54 = scmp.eq.s32.totalorder %s16, 1
      %p55 = scmp.ne.s32.totalorder %s50, %s52
      %p56 = scmp.eq.s32.totalorder %s16, 0
      %p57 = por %p55, %p56
      %p58 = scmp.ne.s32.totalorder %s50, %s52
      %p59 = scmp.eq.s32.totalorder %s21, 1
      %p60 = por %p58, %p59
      %p61 = scmp.ne.s32.totalorder %s52, %s53
      %p62 = scmp.eq.s32.totalorder %s21, 0
      %p63 = por %p61, %p62
      %p64 = scmp.ne.s32.totalorder %s52, %s53
      %p65 = scmp.eq.s32.totalorder %s22, 1
      %p66 = por %p64, %p65
      %p68 = scmp.ne.s32.totalorder %s53, %s67
      %p69 = scmp.eq.s32.totalorder %s22, 0
      %p70 = por %p68, %p69
      %s72 = sadd.s32 %s71, 1
      %p75 = scmp.eq.s32.totalorder %s16, 1
      %p76 = scmp.ne.s32.totalorder %s71, %s73
      %p77 = scmp.eq.s32.totalorder %s16, 0
      %p78 = por %p76, %p77
      %p79 = scmp.ne.s32.totalorder %s71, %s73
      %p80 = scmp.eq.s32.totalorder %s21, 1
      %p81 = por %p79, %p80
      %p82 = scmp.ne.s32.totalorder %s73, %s74
      %p83 = scmp.eq.s32.totalorder %s21, 0
      %p84 = por %p82, %p83
      %p85 = scmp.ne.s32.totalorder %s73, %s74
      %p86 = scmp.eq.s32.totalorder %s22, 1
      %p87 = por %p85, %p86
      %p89 = scmp.ne.s32.totalorder %s74, %s88
      %p90 = scmp.eq.s32.totalorder %s22, 0
      %p91 = por %p89, %p90
      %s93 = sadd.s32 %s92, 1
      %p96 = scmp.eq.s32.totalorder %s16, 1
      %p97 = scmp.ne.s32.totalorder %s92, %s94
      %p98 = scmp.eq.s32.totalorder %s16, 0
      %p99 = por %p97, %p98
      %p100 = scmp.ne.s32.totalorder %s92, %s94
      %p101 = scmp.eq.s32.totalorder %s21, 1
      %p102 = por %p100, %p101
      %p103 = scmp.ne.s32.totalorder %s94, %s95
      %p104 = scmp.eq.s32.totalorder %s21, 0
      %p105 = por %p103, %p104
      %p106 = scmp.ne.s32.totalorder %s94, %s95
      %p107 = scmp.eq.s32.totalorder %s22, 1
      %p108 = por %p106, %p107
      %p110 = scmp.ne.s32.totalorder %s95, %s109
      %p111 = scmp.eq.s32.totalorder %s22, 0
      %p112 = por %p110, %p111
      %s114 = sadd.s32 %s113, 1
      %p117 = scmp.eq.s32.totalorder %s16, 1
      %p118 = scmp.ne.s32.totalorder %s113, %s115
      %p119 = scmp.eq.s32.totalorder %s16, 0
      %p120 = por %p118, %p119
      %p121 = scmp.ne.s32.totalorder %s113, %s115
      %p122 = scmp.eq.s32.totalorder %s21, 1
      %p123 = por %p121, %p122
      %p124 = scmp.ne.s32.totalorder %s115, %s116
      %p125 = scmp.eq.s32.totalorder %s21, 0
      %p126 = por %p124, %p125
      %p127 = scmp.ne.s32.totalorder %s115, %s116
      %p128 = scmp.eq.s32.totalorder %s22, 1
      %p129 = por %p127, %p128
      %p131 = scmp.ne.s32.totalorder %s116, %s130
      %p132 = scmp.eq.s32.totalorder %s22, 0
      %p133 = por %p131, %p132
      %s134 = ssub.s32 %s16, %s23
      %p135 = scmp.eq.s32.totalorder %s134, 0
      %s137 = sadd.s32 %s136, 1
      %s138 = scalar_select %p135, %s136, %s137
      %p141 = pneg %p135
      %p142 = scmp.eq.s32.totalorder %s16, 1
      %p143 = por %p141, %p142
      %p144 = scmp.ne.s32.totalorder %s136, %s139
      %p145 = scmp.eq.s32.totalorder %s16, 0
      %p146 = por %p144, %p145
      %p147 = scmp.ne.s32.totalorder %s136, %s139
      %p148 = scmp.eq.s32.totalorder %s21, 1
      %p149 = por %p147, %p148
      %p150 = scmp.ne.s32.totalorder %s139, %s140
      %p151 = scmp.eq.s32.totalorder %s21, 0
      %p152 = por %p150, %p151
      %p153 = scmp.ne.s32.totalorder %s139, %s140
      %p154 = scmp.eq.s32.totalorder %s22, 1
      %p155 = por %p153, %p154
      %p157 = scmp.ne.s32.totalorder %s140, %s156
      %p158 = scmp.eq.s32.totalorder %s22, 0
      %p159 = por %p157, %p158
      %p160 = scmp.le.s32.totalorder 1, %s16
      %p161 = scmp.lt.s32.totalorder %s16, 3
      %p162 = pnand %p160, %p161
      %p163 = pneg %p162
      // Predicated region
      $region9: #{tpu_custom_call.1} parent=5 // pred_check
        _
      $region10: #{tpu_custom_call.1} parent=5 // pred_check_branch
        %165 = sbr.rel (%p162) target = $region12
      $region11: #{tpu_custom_call.1} parent=5 // pred_region
        %s166 = ssub.s32 %s16, 1
        // Predicated region
        $region13: #{tpu_custom_call.1} parent=11 // pred_check
          %p167 = pneg %p63
        $region14: #{tpu_custom_call.1} parent=11 // pred_check_branch
          %169 = sbr.rel (%p167) target = $region16
        $region15: #{tpu_custom_call.1} parent=11 // pred_region
          _
        $region16: #{tpu_custom_call.1} parent=11 // pred_fallthru
          _
        // Predicated region
        $region17: #{tpu_custom_call.1} parent=11 // pred_check
          %p170 = pneg %p84
        $region18: #{tpu_custom_call.1} parent=11 // pred_check_branch
          %172 = sbr.rel (%p170) target = $region20
        $region19: #{tpu_custom_call.1} parent=11 // pred_region
          _
        $region20: #{tpu_custom_call.1} parent=11 // pred_fallthru
          _
        // Predicated region
        $region21: #{tpu_custom_call.1} parent=11 // pred_check
          %p173 = pneg %p105
        $region22: #{tpu_custom_call.1} parent=11 // pred_check_branch
          %175 = sbr.rel (%p173) target = $region24
        $region23: #{tpu_custom_call.1} parent=11 // pred_region
          _
        $region24: #{tpu_custom_call.1} parent=11 // pred_fallthru
          _
        // Predicated region
        $region25: #{tpu_custom_call.1} parent=11 // pred_check
          %p176 = pneg %p126
        $region26: #{tpu_custom_call.1} parent=11 // pred_check_branch
          %178 = sbr.rel (%p176) target = $region28
        $region27: #{tpu_custom_call.1} parent=11 // pred_region
          _
        $region28: #{tpu_custom_call.1} parent=11 // pred_fallthru
          _
      $region12: #{tpu_custom_call.1} parent=5 // pred_fallthru
        _
      %p179 = scmp.lt.s32.totalorder %s16, 2
      // Predicated region
      $region29: #{tpu_custom_call.1} parent=5 // pred_check
        %p180 = pneg %p179
      $region30: #{tpu_custom_call.1} parent=5 // pred_check_branch
        %182 = sbr.rel (%p180) target = $region32
      $region31: #{tpu_custom_call.1} parent=5 // pred_region
        // Predicated region
        $region33: #{tpu_custom_call.1} parent=31 // pred_check
          %p183 = pneg %p36
        $region34: #{tpu_custom_call.1} parent=31 // pred_check_branch
          %185 = sbr.rel (%p183) target = $region36
        $region35: #{tpu_custom_call.1} parent=31 // pred_region
          %p186 = scmp.lt.s32.totalorder %s16, 1
          %s187 = scalar_select %p186, %s16, 1
          %s188 = smul.addr %s187, 8
          %s189 = scalar_lea.vmem %s1, %s188
        $region36: #{tpu_custom_call.1} parent=31 // pred_fallthru
          _
      $region32: #{tpu_custom_call.1} parent=5 // pred_fallthru
        _
      %p190 = scmp.le.s32.totalorder 1, %s16
      %p191 = scmp.lt.s32.totalorder %s16, 3
      %p192 = pnand %p190, %p191
      %p193 = pneg %p192
      // Predicated region
      $region37: #{tpu_custom_call.1} parent=5 // pred_check
        _
      $region38: #{tpu_custom_call.1} parent=5 // pred_check_branch
        %195 = sbr.rel (%p192) target = $region40
      $region39: #{tpu_custom_call.1} parent=5 // pred_region
        %s196 = ssub.s32 %s16, 1
        %p197 = scmp.lt.s32.totalorder %s21, 1
        %s198 = scalar_select %p197, %s21, 1
        %s199 = smul.addr %s198, 8
        %s200 = scalar_lea.vmem %s1, %s199
        %p201 = pneg %p42
        %p202 = pneg %p39
        %p203 = pneg %p63
        %p204 = pneg %p60
        %p205 = pneg %p84
        %p206 = pneg %p81
        %p207 = pneg %p105
        %p208 = pneg %p102
        %p209 = pneg %p126
        %p210 = pneg %p123
        %p211 = pneg %p152
        %p212 = pneg %p149
        %s213 = sand.u32 %s139, 1
        %s214 = scalar_lea.sflag [#allocation5], %s213
        %s215 = sand.u32 %s139, 1
        %s216 = smul.addr %s215, 8
        %s217 = scalar_lea.vmem [#allocation4], %s216
        %p218 = scmp.lt.s32.totalorder %s21, 1
        %s219 = scalar_select %p218, %s21, 1
        %s220 = smul.addr %s219, 8
        %s221 = scalar_lea.vmem %s1, %s220
        %v223 = vld [vmem:[%s221] sm:$0xff]
        %v224 = vpack.c.bf16 %v223, %v223
        %v225 = vld [vmem:[%s2] sm:$0xf]
        %v226 = vld [vmem:[%s2 + $0x4] sm:$0xf]
        %v227 = vld [vmem:[%s2 + $0x8] sm:$0xf]
        %v228 = vld [vmem:[%s2 + $0xc] sm:$0xf]
        %v233 = vunpack.c.l.b16 %v225
        %v234 = vunpack.c.l.b16 %v226
        %v235 = vunpack.c.l.b16 %v227
        %v236 = vunpack.c.l.b16 %v228
        %v237 = vpack.c.b16 %v234, %v233
        %v238 = vpack.c.b16 %v236, %v235
        %vm241 = vcmask 261120
        %v243 = vsel %vm241, %v224, 0
        %245 = vmatpush.bf16.msra.mxu0 0
        %246 = vmatpush.bf16.msra.mxu0 0
        %247 = vmatpush.bf16.msra.mxu0 0
        %248 = vmatpush.bf16.msra.mxu0 0
        %249 = vmatpush.bf16.msra.mxu0 0
        %250 = vmatpush.bf16.msra.mxu0 0
        %251 = vmatpush.bf16.msra.mxu0 %v238
        %252 = vmatpush.bf16.msra.mxu0 %v237
        %253 = vmatmul.bf16.gmra.mxu0 %v243
        %v254 = vpop.f32.mrf.mxu0
        %v255 = vadd.f32 0.0, %v254
        %v256 = vpop.f32.mrf.mxu0
        %257 = vdwg.mxu0
        %v258 = vpack.c.bf16 %v255, %v255
        %v259 = vld [vmem:[%s3] sm:$0x1]
        %v260 = vpack.c.bf16 %v259, %v259
        %v262 = vpack.i.b16 %v260, %v260
        %v264 = vperm.slane %v262, 0
        %v265 = vunpack.c.l.bf16 %v258
        %v266 = vunpack.c.l.bf16 %v264
        %v267 = vadd.f32 %v265, %v266
        %v268 = vpack.c.bf16 %v267, %v267
        %v269 = vunpack.c.l.bf16 %v268
        %v270 = vmul.f32 %v269, 0.5
        %v271 = vpack.c.bf16 %v270, %v270
        %v272 = vmul.f32 %v269, %v269
        %v273 = vpack.c.bf16 %v272, %v272
        %v274 = vunpack.c.l.bf16 %v273
        %v275 = vmul.f32 %v274, %v269
        %v276 = vpack.c.bf16 %v275, %v275
        %v277 = vunpack.c.l.bf16 %v276
        %v278 = vmul.f32 %v277, 0.044677734
        %v279 = vpack.c.bf16 %v278, %v278
        %v280 = vunpack.c.l.bf16 %v279
        %v281 = vadd.f32 %v269, %v280
        %v282 = vpack.c.bf16 %v281, %v281
        %v283 = vunpack.c.l.bf16 %v282
        %v284 = vmul.f32 %v283, 0.796875
        %v285 = vpack.c.bf16 %v284, %v284
        %v286 = vunpack.c.l.bf16 %v285
        %v287 = vtanh.pop %v286
        %v288 = vpack.c.bf16 %v287, %v287
        %v289 = vunpack.c.l.bf16 %v288
        %v290 = vadd.f32 %v289, 1.0
        %v291 = vpack.c.bf16 %v290, %v290
        %v292 = vunpack.c.l.bf16 %v271
        %v293 = vunpack.c.l.bf16 %v291
        %v294 = vmul.f32 %v292, %v293
        %v295 = vpack.c.bf16 %v294, %v294
        %s296 = sld [smem:[#allocation3]]
        %s297 = smul.u32 %s21, 8
        %v298 = vlaneseq
        %v299 = vshrl.u32 %v298, 7
        %v300 = vlaneseq
        %v301 = vand.u32 %v300, 127
        %v302 = vshll.u32 %v299, 7
        %v303 = vor.u32 %v302, %v301
        %s304 = sshll.u32 %s297, 7
        %v305 = vstv %s304
        %v306 = vadd.s32 %v303, %v305
        %s307 = smul.u32 %s296, 2654435769
        %v308 = vstv %s307
        %v309 = vadd.s32 %v306, %v308
        %v310 = vshrl.u32 %v309, 16
        %v311 = vxor.u32 %v309, %v310
        %v312 = vmul.u32 %v311, 2246822507
        %v313 = vshrl.u32 %v312, 13
        %v314 = vxor.u32 %v312, %v313
        %v315 = vmul.u32 %v314, 3266489909
        %v316 = vshrl.u32 %v315, 16
        %v317 = vxor.u32 %v315, %v316
        %v318 = vadd.s32 %v317, 2147483648
        %vm320 = vcmp.ge.s32.totalorder %v318, 2576980378
        %vm321 = vmpackc.low %vm320, %vm320
        %v322 = vsel %vm321, %v295, 0
        %v323 = vld [vmem:[%s4] sm:$0xf]
        %v324 = vld [vmem:[%s4 + $0x4] sm:$0xf]
        %v325 = vld [vmem:[%s4 + $0x8] sm:$0xf]
        %v326 = vld [vmem:[%s4 + $0xc] sm:$0xf]
        %v327 = vld [vmem:[%s4 + $0x10] sm:$0xf]
        %v328 = vld [vmem:[%s4 + $0x14] sm:$0xf]
        %v329 = vld [vmem:[%s4 + $0x18] sm:$0xf]
        %v330 = vld [vmem:[%s4 + $0x1c] sm:$0xf]
        %v331 = vld [vmem:[%s4 + $0x20] sm:$0xf]
        %v332 = vld [vmem:[%s4 + $0x24] sm:$0xf]
        %v333 = vld [vmem:[%s4 + $0x28] sm:$0xf]
        %v334 = vld [vmem:[%s4 + $0x2c] sm:$0xf]
        %v335 = vld [vmem:[%s4 + $0x30] sm:$0xf]
        %v336 = vld [vmem:[%s4 + $0x34] sm:$0xf]
        %v337 = vld [vmem:[%s4 + $0x38] sm:$0xf]
        %v338 = vld [vmem:[%s4 + $0x3c] sm:$0xf]
        %v355 = vunpack.c.l.b16 %v323
        %v356 = vunpack.c.l.b16 %v324
        %v357 = vunpack.c.l.b16 %v325
        %v358 = vunpack.c.l.b16 %v326
        %v359 = vunpack.c.l.b16 %v327
        %v360 = vunpack.c.l.b16 %v328
        %v361 = vunpack.c.l.b16 %v329
        %v362 = vunpack.c.l.b16 %v330
        %v363 = vunpack.c.l.b16 %v331
        %v364 = vunpack.c.l.b16 %v332
        %v365 = vunpack.c.l.b16 %v333
        %v366 = vunpack.c.l.b16 %v334
        %v367 = vunpack.c.l.b16 %v335
        %v368 = vunpack.c.l.b16 %v336
        %v369 = vunpack.c.l.b16 %v337
        %v370 = vunpack.c.l.b16 %v338
        %v371 = vpack.c.b16 %v356, %v355
        %v372 = vpack.c.b16 %v358, %v357
        %v373 = vpack.c.b16 %v360, %v359
        %v374 = vpack.c.b16 %v362, %v361
        %v375 = vpack.c.b16 %v364, %v363
        %v376 = vpack.c.b16 %v366, %v365
        %v377 = vpack.c.b16 %v368, %v367
        %v378 = vpack.c.b16 %v370, %v369
        %387 = vmatpush.bf16.msra.mxu0 %v378
        %388 = vmatpush.bf16.msra.mxu0 %v377
        %389 = vmatpush.bf16.msra.mxu0 %v376
        %390 = vmatpush.bf16.msra.mxu0 %v375
        %391 = vmatpush.bf16.msra.mxu0 %v374
        %392 = vmatpush.bf16.msra.mxu0 %v373
        %393 = vmatpush.bf16.msra.mxu0 %v372
        %394 = vmatpush.bf16.msra.mxu0 %v371
        %395 = vmatmul.bf16.gmra.mxu0 %v322
        %v396 = vpop.f32.mrf.mxu0
        %v397 = vadd.f32 0.0, %v396
        %v398 = vpop.f32.mrf.mxu0
        %399 = vdwg.mxu0
        %v400 = vmul.f32 %v397, 1.1111112
        %v401 = vld [vmem:[%s5] sm:$0x1]
        %v403 = vperm.slane %v401, 0
        %v405 = vadd.f32 %v400, %v403
        %406 = vst.msk [vmem:[%s217] sm:$0xff] %vm241, %v405
        %s407 = sand.u32 %s139, 1
        %s408 = scalar_lea.sflag [#allocation5], %s407
        %s409 = sand.u32 %s139, 1
        %s410 = smul.addr %s409, 8
        %s411 = scalar_lea.vmem [#allocation4], %s410
        // Predicated region
        $region41: #{tpu_custom_call.1} parent=39 // pred_check
          %p412 = pneg %p149
        $region42: #{tpu_custom_call.1} parent=39 // pred_check_branch
          %414 = sbr.rel (%p412) target = $region44
        $region43: #{tpu_custom_call.1} parent=39 // pred_region
          %416 = vsyncadd %s408, 0
          %s417 = smul.addr %s21, 8
          %s418 = scalar_lea.hbm %s6, %s417
          %s420 = sshll.u32 %s411, 4
          %s421 = int_to_ptr.vmem [resolvable:$true] %s420
          %s422 = sshll.u32 %s418, 4
          %s423 = int_to_ptr.hbm [resolvable:$true] %s422
          %425 = dma.vmem_to_hbm [thread:$0]  %s421, 128, %s423, %s408
        $region44: #{tpu_custom_call.1} parent=39 // pred_fallthru
          _
      $region40: #{tpu_custom_call.1} parent=5 // pred_fallthru
        _
      %p426 = scmp.le.s32.totalorder 2, %s16
      // Predicated region
      $region45: #{tpu_custom_call.1} parent=5 // pred_check
        %p427 = pneg %p426
      $region46: #{tpu_custom_call.1} parent=5 // pred_check_branch
        %429 = sbr.rel (%p427) target = $region48
      $region47: #{tpu_custom_call.1} parent=5 // pred_region
        %s430 = ssub.s32 %s16, 2
        // Predicated region
        $region49: #{tpu_custom_call.1} parent=47 // pred_check
          %p431 = pneg %p155
        $region50: #{tpu_custom_call.1} parent=47 // pred_check_branch
          %433 = sbr.rel (%p431) target = $region52
        $region51: #{tpu_custom_call.1} parent=47 // pred_region
          %s434 = sand.u32 %s140, 1
          %s435 = scalar_lea.sflag [#allocation5], %s434
          %s436 = sand.u32 %s140, 1
          %s437 = smul.addr %s436, 8
          %s438 = scalar_lea.vmem [#allocation4], %s437
          %440 = dma.done %s435, 128
        $region52: #{tpu_custom_call.1} parent=47 // pred_fallthru
          _
      $region48: #{tpu_custom_call.1} parent=5 // pred_fallthru
        _
    $region6: #{tpu_custom_call.1} parent=1 // loop_footer
      %s20 = sadd.s32 1, %s16
    $region7: #{tpu_custom_call.1} parent=1 // loop_footer_branch
      %15 = sbr.rel target = $region3
    $region8: #{tpu_custom_call.1} parent=1 // loop_exit
      _
    %441 = vsyncpa [#allocation5], 1
    %s442 = scalar_lea.sflag [#allocation5], 1
    %443 = vsyncpa %s442, 1

</llo_original>
